<compile_context>
chip_gen: v7x
topology: tpu7x:2x2x1
jax: 0.10.0
libtpu: 0.0.40
codegen_flags: <defaults>
</compile_context>

<pallas_src>
import numpy as np
import jax
import jax.numpy as jnp
from jax.experimental import pallas as pl
from jax.experimental.pallas import tpu as pltpu

# ----- static model config -----
N, C_IN, H, W = 2, 4, 16, 16
K = 3                                   # conv kernel, stride=1, pad=1
C_OUT = 8
NUM_CLASSES = 10

HP, WP = H + 2, W + 2                   # spatially padded sizes
X2_COLS = WP * C_IN                     # 72 lanes per kh-shifted view
CONV_ROWS = H * N                       # 32 conv-output rows (h, n)
LANES = W * C_OUT                       # 128 conv-output lanes (w, c_out) -- lane dense
K_REAL = K * X2_COLS + 1                # 217: three views + constant-1 bias lane
K_PAD = 256                             # contraction depth padded to MXU depth
OUT_ROWS = 16                           # sublane-padded output rows (only rows < N used)

# packed-parameter slab row offsets (all multiples of the bf16 sublane tile = 16)
R_BIGW = 0                              # 256 rows: block-Toeplitz conv weight + bias row + pad
R_POOL = K_PAD                          # 256: mean-over-h selection matrix (16 x 128)
R_FC = R_POOL + 16                      # 272: lane-tiled fc weight (128 x 128)
R_FBIAS = R_FC + LANES                  # 400: fc bias (row 0 of a 16-row block)
P_ROWS = R_FBIAS + 16                   # 416 total rows


def _main_model_kernel(x2_ref, p_ref, out_ref):
    """Fused conv3x3(+bias) + ReLU + global-avg-pool + linear, all as bf16 MXU matmuls.

    x2_ref:  (32, 256) bf16  rows=(h*N+n); lanes=kh*72+wp*4+ci, lane 216 = 1.0, rest pad
    p_ref:   (416, 128) bf16 packed parameter slab (layout above)
    out_ref: (16, 128) f32   lane-dense logits; rows >= N and lanes >= NUM_CLASSES are pad
    """
    # 3x3 conv + conv-bias as ONE 256-deep matmul (bias via the constant-1 lane).
    acc = jnp.dot(x2_ref[...], p_ref[R_BIGW:R_BIGW + K_PAD, :],
                  preferred_element_type=jnp.float32)                     # (32, 128) f32

    # ReLU in f32, single downcast for the follow-up matmuls.
    rel = jnp.maximum(acc, 0.0).astype(jnp.bfloat16)                      # (32, 128)

    # mean over h via a constant selection/scale matmul (1/256 is exact in bf16).
    pooled = jnp.dot(p_ref[R_POOL:R_POOL + OUT_ROWS, 0:CONV_ROWS], rel,
                     preferred_element_type=jnp.float32)                  # (16, 128) f32

    # mean over w + final Linear fused into one lane-tiled (128, 128) matmul.
    logits = jnp.dot(pooled.astype(jnp.bfloat16), p_ref[R_FC:R_FC + LANES, :],
                     preferred_element_type=jnp.float32)                  # (16, 128) f32
    out_ref[...] = logits + p_ref[R_FBIAS:R_FBIAS + 1, :].astype(jnp.float32)


def pack_params(conv_w, conv_b, fc_w, fc_b):
    """Pack all parameters into one lane-dense (416, 128) bf16 slab (call once)."""
    conv_w = jnp.asarray(conv_w, jnp.float32)
    # Block-Toeplitz conv weight:
    #   BigW[kh*72 + wp*4 + ci, w*8 + co] = conv_w[co, ci, kh, wp - w] if 0 <= wp - w < 3.
    ind = (np.arange(WP)[None, :, None]
           == np.arange(W)[None, None, :] + np.arange(K)[:, None, None]).astype(np.float32)
    big_w = jnp.einsum('kpw,ochk->hpcwo', jnp.asarray(ind), conv_w)
    big_w = big_w.reshape(K * X2_COLS, LANES)                              # (216, 128)
    # conv bias contracted in via the constant-1 activation lane (row 216); zero-pad to 256.
    bias_row = jnp.tile(jnp.asarray(conv_b, jnp.float32), W)[None, :]      # (1, 128)
    big_w = jnp.concatenate(
        [big_w, bias_row,
         jnp.zeros((K_PAD - K * X2_COLS - 1, LANES), jnp.float32)], axis=0)  # (256, 128)

    # mean-over-h selection matrix, pre-scaled by 1/(H*W) (exact power of two).
    pool = np.zeros((OUT_ROWS, LANES), np.float32)
    for n in range(N):
        pool[n, np.arange(H) * N + n] = 1.0 / (H * W)                      # (16, 128)

    # fc weight lane-tiled over w so the w-fold and the Linear fuse into one matmul;
    # class lanes zero-padded to 128 for lane-dense output stores.
    wf = jnp.tile(jnp.asarray(fc_w, jnp.float32).T, (W, 1))                # (128, 10)
    wf = jnp.pad(wf, ((0, 0), (0, LANES - NUM_CLASSES)))                   # (128, 128)

    fbias = jnp.zeros((OUT_ROWS, LANES), jnp.float32).at[0, :NUM_CLASSES].set(
        jnp.asarray(fc_b, jnp.float32))                                    # (16, 128)

    slab = jnp.concatenate([big_w, jnp.asarray(pool), wf, fbias], axis=0)  # (416, 128)
    return slab.astype(jnp.bfloat16)


def _pack_activations(x):
    """(N, C_IN, H, W) f32 -> (32, 256) bf16 lhs: rows=(h,n); lanes=(kh,wp,ci)+bias lane+pad."""
    xt = jnp.transpose(x, (2, 0, 3, 1))                        # (H, N, W, C_IN)
    xp = jnp.pad(xt, ((1, 1), (0, 0), (1, 1), (0, 0)))         # (HP, N, WP, C_IN)
    views = [xp[kh:kh + H].reshape(CONV_ROWS, X2_COLS) for kh in range(K)]   # 3 x (32, 72)
    ones = jnp.ones((CONV_ROWS, 1), xp.dtype)                  # constant-1 conv-bias lane
    x2 = jnp.concatenate(views + [ones], axis=1)               # (32, 217)
    x2 = jnp.pad(x2, ((0, 0), (0, K_PAD - K_REAL)))            # (32, 256)
    return x2.astype(jnp.bfloat16)


def _forward_padded(x2, params):
    """Pre-packed (32,256) bf16 activations + (416,128) bf16 slab -> padded (16,128) f32."""
    return pl.pallas_call(
        _main_model_kernel,
        out_shape=jax.ShapeDtypeStruct((OUT_ROWS, LANES), jnp.float32),
        in_specs=[
            pl.BlockSpec(memory_space=pltpu.MemorySpace.VMEM),
            pl.BlockSpec(memory_space=pltpu.MemorySpace.VMEM),
        ],
        out_specs=pl.BlockSpec(memory_space=pltpu.MemorySpace.VMEM),
        cost_estimate=pl.CostEstimate(flops=2_500_000, transcendentals=0,
                                      bytes_accessed=128_000),
    )(x2, params)


@jax.jit
def main_model_forward(x, params):
    """x: (N, C_IN, H, W) f32 NCHW; params: packed (416,128) bf16 slab -> (N, NUM_CLASSES)."""
    out = _forward_padded(_pack_activations(x), params)
    # Overhead-sensitive consumers can call _forward_padded directly with a pre-packed
    # activation slab and take the padded (16, 128) block (skips relayout + slice).
    return out[:N, :NUM_CLASSES]


def _reference_forward(x, conv_w, conv_b, fc_w, fc_b):
    """Independent pure-JAX f32 reference of the assumed forward."""
    xp = jnp.pad(x, ((0, 0), (0, 0), (1, 1), (1, 1)))
    conv = jnp.zeros((N, C_OUT, H, W), jnp.float32)
    for kh in range(K):
        for kw in range(K):
            conv = conv + jnp.einsum('nchw,oc->nohw',
                                     xp[:, :, kh:kh + H, kw:kw + W],
                                     conv_w[:, :, kh, kw])
    conv = jnp.maximum(conv + conv_b[None, :, None, None], 0.0)
    pooled = conv.mean(axis=(2, 3))
    return pooled @ fc_w.T + fc_b


def _init_params(key):
    """Deterministic synthetic parameters (PyTorch-style shapes)."""
    kw, kb, fw, fb = jax.random.split(key, 4)
    conv_w = jax.random.normal(kw, (C_OUT, C_IN, K, K), jnp.float32) * 0.1
    conv_b = jax.random.normal(kb, (C_OUT,), jnp.float32) * 0.1
    fc_w = jax.random.normal(fw, (NUM_CLASSES, C_OUT), jnp.float32) * 0.1
    fc_b = jax.random.normal(fb, (NUM_CLASSES,), jnp.float32) * 0.1
    return conv_w, conv_b, fc_w, fc_b


if __name__ == "__main__":
    root = jax.random.PRNGKey(0)
    kx, kp = jax.random.split(root)
    x = jax.random.normal(kx, (N, C_IN, H, W), jnp.float32)
    conv_w, conv_b, fc_w, fc_b = _init_params(kp)

    params = pack_params(conv_w, conv_b, fc_w, fc_b)   # done once, off the hot path
    out = main_model_forward(x, params)
    jax.block_until_ready(out)

    assert out.shape == (N, NUM_CLASSES) and out.dtype == jnp.float32
    ref = _reference_forward(x, conv_w, conv_b, fc_w, fc_b)
    # bf16 weights/activations with f32 accumulation: 1e-2 tolerance vs the f32 reference.
    assert bool(jnp.allclose(out, ref, atol=1e-2, rtol=1e-2)), (
        f"max abs err {jnp.max(jnp.abs(out - ref))}")
    print("KERNEL_OK")
</pallas_src>

<mosaic_0001>
module attributes {stable_mosaic.version = 11 : i64} {
  func.func @_main_model_kernel(%arg0: memref<32x256xbf16, #tpu.memory_space<vmem>>, %arg1: memref<416x128xbf16, #tpu.memory_space<vmem>>, %arg2: memref<16x128xf32, #tpu.memory_space<vmem>>) attributes {dimension_semantics = [], scalar_prefetch = 0 : i64, scratch_operands = 0 : i64, tpu.core_type = #tpu.core_type<tc>} {
    %c0 = arith.constant 0 : index
    %c0_0 = arith.constant 0 : index
    %0 = vector.load %arg0[%c0, %c0_0] : memref<32x256xbf16, #tpu.memory_space<vmem>>, vector<32x256xbf16>
    %c0_1 = arith.constant 0 : index
    %c0_2 = arith.constant 0 : index
    %1 = vector.load %arg1[%c0_1, %c0_2] : memref<416x128xbf16, #tpu.memory_space<vmem>>, vector<256x128xbf16>
    %cst = arith.constant dense<0.000000e+00> : vector<32x128xf32>
    %2 = tpu.matmul %0, %1, %cst {dimension_numbers = #tpu.dot_dimension_numbers<[1], [0], [0], [1], [0, 0, 1, 1], [], []>} : vector<32x256xbf16>, vector<256x128xbf16>, vector<32x128xf32> -> vector<32x128xf32>
    %cst_3 = arith.constant 0.000000e+00 : f32
    %3 = vector.broadcast %cst_3 : f32 to vector<32x128xf32>
    %4 = arith.maximumf %2, %3 : vector<32x128xf32>
    %5 = arith.truncf %4 : vector<32x128xf32> to vector<32x128xbf16>
    %c256 = arith.constant 256 : index
    %c0_4 = arith.constant 0 : index
    %6 = vector.load %arg1[%c256, %c0_4] : memref<416x128xbf16, #tpu.memory_space<vmem>>, vector<16x32xbf16>
    %cst_5 = arith.constant dense<0.000000e+00> : vector<16x128xf32>
    %7 = tpu.matmul %6, %5, %cst_5 {dimension_numbers = #tpu.dot_dimension_numbers<[1], [0], [0], [1], [0, 0, 1, 1], [], []>} : vector<16x32xbf16>, vector<32x128xbf16>, vector<16x128xf32> -> vector<16x128xf32>
    %8 = arith.truncf %7 : vector<16x128xf32> to vector<16x128xbf16>
    %c272 = arith.constant 272 : index
    %c0_6 = arith.constant 0 : index
    %9 = vector.load %arg1[%c272, %c0_6] : memref<416x128xbf16, #tpu.memory_space<vmem>>, vector<128x128xbf16>
    %cst_7 = arith.constant dense<0.000000e+00> : vector<16x128xf32>
    %10 = tpu.matmul %8, %9, %cst_7 {dimension_numbers = #tpu.dot_dimension_numbers<[1], [0], [0], [1], [0, 0, 1, 1], [], []>} : vector<16x128xbf16>, vector<128x128xbf16>, vector<16x128xf32> -> vector<16x128xf32>
    %c400 = arith.constant 400 : index
    %c0_8 = arith.constant 0 : index
    %11 = vector.load %arg1[%c400, %c0_8] : memref<416x128xbf16, #tpu.memory_space<vmem>>, vector<1x128xbf16>
    %12 = arith.extf %11 : vector<1x128xbf16> to vector<1x128xf32>
    %13 = vector.broadcast %12 : vector<1x128xf32> to vector<16x128xf32>
    %14 = arith.addf %10, %13 : vector<16x128xf32>
    %c0_9 = arith.constant 0 : index
    %c0_10 = arith.constant 0 : index
    %15 = vector.load %arg2[%c0_9, %c0_10] : memref<16x128xf32, #tpu.memory_space<vmem>>, vector<16x128xf32>
    tpu.vector_store %arg2[%c0_9, %c0_10], %14 {strides = array<i32>} : memref<16x128xf32, #tpu.memory_space<vmem>>, vector<16x128xf32>,
    return
  }
}

</mosaic_0001>

<llo_original>
// kernel: main_model_forward.1
$region0: #{main_model_forward.1}
  #allocation0 [shape = 'u32[]', space=smem, size = 0x4, offset = 0x4, fixed_abs, tag = 'smem constant byte address 0x4 - core index']
  #allocation1 [shape = 'u32[144,128]{1,0:T(1,128)}', space=vmem, size = 0x12000, scoped, tag = 'internal scratch']
  %s0 = inlined_call_operand.vmem [shape: bf16[32,256], index: 0, kind: input, shape index: {}]
  %s1 = inlined_call_operand.vmem [shape: bf16[416,128], index: 1, kind: input, shape index: {}]
  %s2 = inlined_call_operand.vmem [shape: f32[16,128], index: 2, kind: output, shape index: {}]
  %s3 = sld [smem:[#allocation0]]
  $region18: #{main_model_forward.1} parent=0
    _
  %s5 = ssub.s32 1, %s3
  %s6 = scalar_select 0, %s5, %s3
  // Predicated region
  $region2: #{main_model_forward.1} parent=0 // pred_check
    _
  $region3: #{main_model_forward.1} parent=0 // pred_check_branch
    %8 = sbr.rel (0) target = $region5
  $region4: #{main_model_forward.1} parent=0 // pred_region
    _
  $region5: #{main_model_forward.1} parent=0 // pred_fallthru
    _
  // Predicated region
  $region6: #{main_model_forward.1} parent=0 // pred_check
    _
  $region7: #{main_model_forward.1} parent=0 // pred_check_branch
    %10 = sbr.rel (0) target = $region9
  $region8: #{main_model_forward.1} parent=0 // pred_region
    _
  $region9: #{main_model_forward.1} parent=0 // pred_fallthru
    _
  %v12 = vld [vmem:[%s0] sm:$0xff]
  %v13 = vld [vmem:[%s0 + $0x8] sm:$0xff]
  %v14 = vld [vmem:[%s0 + $0x10] sm:$0xff]
  %v15 = vld [vmem:[%s0 + $0x18] sm:$0xff]
  %v16 = vld [vmem:[%s1] sm:$0xf]
  %v17 = vld [vmem:[%s1 + $0x4] sm:$0xf]
  %v18 = vld [vmem:[%s1 + $0x8] sm:$0xf]
  %v19 = vld [vmem:[%s1 + $0xc] sm:$0xf]
  %v20 = vld [vmem:[%s1 + $0x10] sm:$0xf]
  %v21 = vld [vmem:[%s1 + $0x14] sm:$0xf]
  %v22 = vld [vmem:[%s1 + $0x18] sm:$0xf]
  %v23 = vld [vmem:[%s1 + $0x1c] sm:$0xf]
  %v24 = vld [vmem:[%s1 + $0x20] sm:$0xf]
  %v25 = vld [vmem:[%s1 + $0x24] sm:$0xf]
  %v26 = vld [vmem:[%s1 + $0x28] sm:$0xf]
  %v27 = vld [vmem:[%s1 + $0x2c] sm:$0xf]
  %v28 = vld [vmem:[%s1 + $0x30] sm:$0xf]
  %v29 = vld [vmem:[%s1 + $0x34] sm:$0xf]
  %v30 = vld [vmem:[%s1 + $0x38] sm:$0xf]
  %v31 = vld [vmem:[%s1 + $0x3c] sm:$0xf]
  %v32 = vld [vmem:[%s1 + $0x40] sm:$0xf]
  %v33 = vld [vmem:[%s1 + $0x44] sm:$0xf]
  %v34 = vld [vmem:[%s1 + $0x48] sm:$0xf]
  %v35 = vld [vmem:[%s1 + $0x4c] sm:$0xf]
  %v36 = vld [vmem:[%s1 + $0x50] sm:$0xf]
  %v37 = vld [vmem:[%s1 + $0x54] sm:$0xf]
  %v38 = vld [vmem:[%s1 + $0x58] sm:$0xf]
  %v39 = vld [vmem:[%s1 + $0x5c] sm:$0xf]
  %v40 = vld [vmem:[%s1 + $0x60] sm:$0xf]
  %v41 = vld [vmem:[%s1 + $0x64] sm:$0xf]
  %v42 = vld [vmem:[%s1 + $0x68] sm:$0xf]
  %v43 = vld [vmem:[%s1 + $0x6c] sm:$0xf]
  %v44 = vld [vmem:[%s1 + $0x70] sm:$0xf]
  %v45 = vld [vmem:[%s1 + $0x74] sm:$0xf]
  %v46 = vld [vmem:[%s1 + $0x78] sm:$0xf]
  %v47 = vld [vmem:[%s1 + $0x7c] sm:$0xf]
  %v52 = vunpack.c.l.b16 %v12
  %v53 = vunpack.c.h.b16 %v12
  %v54 = vunpack.c.l.b16 %v13
  %v55 = vunpack.c.h.b16 %v13
  %v56 = vunpack.c.l.b16 %v14
  %v57 = vunpack.c.h.b16 %v14
  %v58 = vunpack.c.l.b16 %v15
  %v59 = vunpack.c.h.b16 %v15
  %v60 = vpack.c.b16 %v54, %v52
  %v61 = vpack.c.b16 %v55, %v53
  %v62 = vpack.c.b16 %v58, %v56
  %v63 = vpack.c.b16 %v59, %v57
  %v100 = vunpack.c.l.b16 %v16
  %v101 = vunpack.c.l.b16 %v17
  %v102 = vunpack.c.l.b16 %v18
  %v103 = vunpack.c.l.b16 %v19
  %v104 = vunpack.c.l.b16 %v20
  %v105 = vunpack.c.l.b16 %v21
  %v106 = vunpack.c.l.b16 %v22
  %v107 = vunpack.c.l.b16 %v23
  %v108 = vunpack.c.l.b16 %v24
  %v109 = vunpack.c.l.b16 %v25
  %v110 = vunpack.c.l.b16 %v26
  %v111 = vunpack.c.l.b16 %v27
  %v112 = vunpack.c.l.b16 %v28
  %v113 = vunpack.c.l.b16 %v29
  %v114 = vunpack.c.l.b16 %v30
  %v115 = vunpack.c.l.b16 %v31
  %v116 = vunpack.c.l.b16 %v32
  %v117 = vunpack.c.l.b16 %v33
  %v118 = vunpack.c.l.b16 %v34
  %v119 = vunpack.c.l.b16 %v35
  %v120 = vunpack.c.l.b16 %v36
  %v121 = vunpack.c.l.b16 %v37
  %v122 = vunpack.c.l.b16 %v38
  %v123 = vunpack.c.l.b16 %v39
  %v124 = vunpack.c.l.b16 %v40
  %v125 = vunpack.c.l.b16 %v41
  %v126 = vunpack.c.l.b16 %v42
  %v127 = vunpack.c.l.b16 %v43
  %v128 = vunpack.c.l.b16 %v44
  %v129 = vunpack.c.l.b16 %v45
  %v130 = vunpack.c.l.b16 %v46
  %v131 = vunpack.c.l.b16 %v47
  %v132 = vpack.c.b16 %v101, %v100
  %v133 = vpack.c.b16 %v103, %v102
  %v134 = vpack.c.b16 %v105, %v104
  %v135 = vpack.c.b16 %v107, %v106
  %v136 = vpack.c.b16 %v109, %v108
  %v137 = vpack.c.b16 %v111, %v110
  %v138 = vpack.c.b16 %v113, %v112
  %v139 = vpack.c.b16 %v115, %v114
  %v140 = vpack.c.b16 %v117, %v116
  %v141 = vpack.c.b16 %v119, %v118
  %v142 = vpack.c.b16 %v121, %v120
  %v143 = vpack.c.b16 %v123, %v122
  %v144 = vpack.c.b16 %v125, %v124
  %v145 = vpack.c.b16 %v127, %v126
  %v146 = vpack.c.b16 %v129, %v128
  %v147 = vpack.c.b16 %v131, %v130
  %164 = vmatprep.subr.bf16.mxu0 0
  %165 = vmatpush1.bf16.msra.mxu0 %v132
  %166 = vmatprep.subr.bf16.mxu0 0
  %167 = vmatpush1.bf16.msra.mxu0 %v133
  %168 = vmatprep.subr.bf16.mxu0 0
  %169 = vmatpush1.bf16.msra.mxu0 %v134
  %170 = vmatprep.subr.bf16.mxu0 0
  %171 = vmatpush1.bf16.msra.mxu0 %v135
  %172 = vmatprep.subr.bf16.mxu0 0
  %173 = vmatpush1.bf16.msra.mxu0 %v136
  %174 = vmatprep.subr.bf16.mxu0 0
  %175 = vmatpush1.bf16.msra.mxu0 %v137
  %176 = vmatprep.subr.bf16.mxu0 0
  %177 = vmatpush1.bf16.msra.mxu0 %v138
  %178 = vmatprep.subr.bf16.mxu0 0
  %179 = vmatpush1.bf16.msra.mxu0 %v139
  %180 = vmatprep.subr.bf16.mxu0 0
  %181 = vmatpush1.bf16.msra.mxu0 %v140
  %182 = vmatprep.subr.bf16.mxu0 0
  %183 = vmatpush1.bf16.msra.mxu0 %v141
  %184 = vmatprep.subr.bf16.mxu0 0
  %185 = vmatpush1.bf16.msra.mxu0 %v142
  %186 = vmatprep.subr.bf16.mxu0 0
  %187 = vmatpush1.bf16.msra.mxu0 %v143
  %188 = vmatprep.subr.bf16.mxu0 0
  %189 = vmatpush1.bf16.msra.mxu0 %v144
  %190 = vmatprep.subr.bf16.mxu0 0
  %191 = vmatpush1.bf16.msra.mxu0 %v145
  %192 = vmatprep.subr.bf16.mxu0 0
  %193 = vmatpush1.bf16.msra.mxu0 %v146
  %194 = vmatprep.subr.bf16.mxu0 0
  %195 = vmatpush1.bf16.msra.mxu0 %v147
  %196 = vmatprep.mubr.bf16.mxu0 %v61
  %197 = vmatmul.mubr.bf16.gmra.mrb[0].mxu0 %v60
  %v198 = vpop.f32.mrb[0].mxu0
  %v199 = vadd.f32 0.0, %v198
  %v200 = vpop.f32.mrb[0].mxu0
  %v201 = vpop.f32.mrb[0].mxu0
  %v202 = vadd.f32 0.0, %v201
  %v203 = vpop.f32.mrb[0].mxu0
  %204 = vmatprep.mubr.bf16.mxu0 %v63
  %205 = vmatmul.mubr.bf16.gmra.mrb[0].mxu0 %v62
  %v206 = vpop.f32.mrb[0].mxu0
  %v207 = vadd.f32 0.0, %v206
  %v208 = vpop.f32.mrb[0].mxu0
  %v209 = vpop.f32.mrb[0].mxu0
  %v210 = vadd.f32 0.0, %v209
  %v211 = vpop.f32.mrb[0].mxu0
  %212 = vdwg.mxu0
  %v213 = vmax.f32 %v199, 0.0
  %v214 = vmax.f32 %v202, 0.0
  %v215 = vmax.f32 %v207, 0.0
  %v216 = vmax.f32 %v210, 0.0
  %v217 = vpack.c.bf16 %v214, %v213
  %v218 = vpack.c.bf16 %v216, %v215
  %v219 = vld [vmem:[%s1 + $0x80] sm:$0xf]
  %v220 = vld [vmem:[%s1 + $0x84] sm:$0xf]
  %v223 = vunpack.c.l.b16 %v219
  %v224 = vunpack.c.l.b16 %v220
  %v225 = vpack.c.b16 %v224, %v223
  %vm226 = vcmask 261120
  %v228 = vsel %vm226, %v225, 0
  %230 = vmatprep.subr.bf16.mxu0 0
  %231 = vmatpush1.bf16.msra.mxu0 %v217
  %232 = vmatprep.subr.bf16.mxu0 0
  %233 = vmatpush1.bf16.msra.mxu0 %v218
  %234 = vmatprep.subr.bf16.mxu0 0
  %235 = vmatpush1.bf16.msra.mxu0 0
  %236 = vmatprep.subr.bf16.mxu0 0
  %237 = vmatpush1.bf16.msra.mxu0 0
  %238 = vmatprep.subr.bf16.mxu0 0
  %239 = vmatpush1.bf16.msra.mxu0 0
  %240 = vmatprep.subr.bf16.mxu0 0
  %241 = vmatpush1.bf16.msra.mxu0 0
  %242 = vmatprep.subr.bf16.mxu0 0
  %243 = vmatpush1.bf16.msra.mxu0 0
  %244 = vmatprep.subr.bf16.mxu0 0
  %245 = vmatpush1.bf16.msra.mxu0 0
  %246 = vmatprep.subr.bf16.mxu0 0
  %247 = vmatpush1.bf16.msra.mxu0 0
  %248 = vmatprep.subr.bf16.mxu0 0
  %249 = vmatpush1.bf16.msra.mxu0 0
  %250 = vmatprep.subr.bf16.mxu0 0
  %251 = vmatpush1.bf16.msra.mxu0 0
  %252 = vmatprep.subr.bf16.mxu0 0
  %253 = vmatpush1.bf16.msra.mxu0 0
  %254 = vmatprep.subr.bf16.mxu0 0
  %255 = vmatpush1.bf16.msra.mxu0 0
  %256 = vmatprep.subr.bf16.mxu0 0
  %257 = vmatpush1.bf16.msra.mxu0 0
  %258 = vmatprep.subr.bf16.mxu0 0
  %259 = vmatpush1.bf16.msra.mxu0 0
  %260 = vmatprep.subr.bf16.mxu0 0
  %261 = vmatpush1.bf16.msra.mxu0 0
  %262 = vmatprep.mubr.bf16.mxu0 0
  %263 = vmatmul.mubr.bf16.gmra.mrb[0].mxu0 %v228
  %v264 = vpop.f32.mrb[0].mxu0
  %v265 = vadd.f32 0.0, %v264
  %v266 = vpop.f32.mrb[0].mxu0
  %v267 = vpop.f32.mrb[0].mxu0
  %v268 = vadd.f32 0.0, %v267
  %v269 = vpop.f32.mrb[0].mxu0
  %270 = vdwg.mxu0
  %v271 = vpack.c.bf16 %v268, %v265
  %v272 = vld [vmem:[%s1 + $0x88] sm:$0xf]
  %v273 = vld [vmem:[%s1 + $0x8c] sm:$0xf]
  %v274 = vld [vmem:[%s1 + $0x90] sm:$0xf]
  %v275 = vld [vmem:[%s1 + $0x94] sm:$0xf]
  %v276 = vld [vmem:[%s1 + $0x98] sm:$0xf]
  %v277 = vld [vmem:[%s1 + $0x9c] sm:$0xf]
  %v278 = vld [vmem:[%s1 + $0xa0] sm:$0xf]
  %v279 = vld [vmem:[%s1 + $0xa4] sm:$0xf]
  %v280 = vld [vmem:[%s1 + $0xa8] sm:$0xf]
  %v281 = vld [vmem:[%s1 + $0xac] sm:$0xf]
  %v282 = vld [vmem:[%s1 + $0xb0] sm:$0xf]
  %v283 = vld [vmem:[%s1 + $0xb4] sm:$0xf]
  %v284 = vld [vmem:[%s1 + $0xb8] sm:$0xf]
  %v285 = vld [vmem:[%s1 + $0xbc] sm:$0xf]
  %v286 = vld [vmem:[%s1 + $0xc0] sm:$0xf]
  %v287 = vld [vmem:[%s1 + $0xc4] sm:$0xf]
  %v288 = vld [vmem:[%s1 + $0xc8] sm:$0x1]
  %v289 = vunpack.c.l.bf16 %v288
  %v290 = vlaneseq
  %v291 = vshrl.u32 %v290, 7
  %v292 = vsub.s32 0, %v291
  %v293 = vrot.slane %v289, %v292
  %v310 = vunpack.c.l.b16 %v272
  %v311 = vunpack.c.l.b16 %v273
  %v312 = vunpack.c.l.b16 %v274
  %v313 = vunpack.c.l.b16 %v275
  %v314 = vunpack.c.l.b16 %v276
  %v315 = vunpack.c.l.b16 %v277
  %v316 = vunpack.c.l.b16 %v278
  %v317 = vunpack.c.l.b16 %v279
  %v318 = vunpack.c.l.b16 %v280
  %v319 = vunpack.c.l.b16 %v281
  %v320 = vunpack.c.l.b16 %v282
  %v321 = vunpack.c.l.b16 %v283
  %v322 = vunpack.c.l.b16 %v284
  %v323 = vunpack.c.l.b16 %v285
  %v324 = vunpack.c.l.b16 %v286
  %v325 = vunpack.c.l.b16 %v287
  %v326 = vpack.c.b16 %v311, %v310
  %v327 = vpack.c.b16 %v313, %v312
  %v328 = vpack.c.b16 %v315, %v314
  %v329 = vpack.c.b16 %v317, %v316
  %v330 = vpack.c.b16 %v319, %v318
  %v331 = vpack.c.b16 %v321, %v320
  %v332 = vpack.c.b16 %v323, %v322
  %v333 = vpack.c.b16 %v325, %v324
  %342 = vmatprep.subr.bf16.mxu0 0
  %343 = vmatpush1.bf16.msra.mxu0 %v326
  %344 = vmatprep.subr.bf16.mxu0 0
  %345 = vmatpush1.bf16.msra.mxu0 %v327
  %346 = vmatprep.subr.bf16.mxu0 0
  %347 = vmatpush1.bf16.msra.mxu0 %v328
  %348 = vmatprep.subr.bf16.mxu0 0
  %349 = vmatpush1.bf16.msra.mxu0 %v329
  %350 = vmatprep.subr.bf16.mxu0 0
  %351 = vmatpush1.bf16.msra.mxu0 %v330
  %352 = vmatprep.subr.bf16.mxu0 0
  %353 = vmatpush1.bf16.msra.mxu0 %v331
  %354 = vmatprep.subr.bf16.mxu0 0
  %355 = vmatpush1.bf16.msra.mxu0 %v332
  %356 = vmatprep.subr.bf16.mxu0 0
  %357 = vmatpush1.bf16.msra.mxu0 %v333
  %358 = vmatprep.subr.bf16.mxu0 0
  %359 = vmatpush1.bf16.msra.mxu0 0
  %360 = vmatprep.subr.bf16.mxu0 0
  %361 = vmatpush1.bf16.msra.mxu0 0
  %362 = vmatprep.subr.bf16.mxu0 0
  %363 = vmatpush1.bf16.msra.mxu0 0
  %364 = vmatprep.subr.bf16.mxu0 0
  %365 = vmatpush1.bf16.msra.mxu0 0
  %366 = vmatprep.subr.bf16.mxu0 0
  %367 = vmatpush1.bf16.msra.mxu0 0
  %368 = vmatprep.subr.bf16.mxu0 0
  %369 = vmatpush1.bf16.msra.mxu0 0
  %370 = vmatprep.subr.bf16.mxu0 0
  %371 = vmatpush1.bf16.msra.mxu0 0
  %372 = vmatprep.subr.bf16.mxu0 0
  %373 = vmatpush1.bf16.msra.mxu0 0
  %374 = vmatprep.mubr.bf16.mxu0 0
  %375 = vmatmul.mubr.bf16.gmra.mrb[0].mxu0 %v271
  %v376 = vpop.f32.mrb[0].mxu0
  %v377 = vadd.f32 %v293, %v376
  %v378 = vpop.f32.mrb[0].mxu0
  %v379 = vpop.f32.mrb[0].mxu0
  %v380 = vadd.f32 %v293, %v379
  %v381 = vpop.f32.mrb[0].mxu0
  %382 = vdwg.mxu0
  %383 = vst [vmem:[%s2] sm:$0xff] %v377
  %384 = vst [vmem:[%s2 + $0x8] sm:$0xff] %v380
  // Predicated region
  $region10: #{main_model_forward.1} parent=0 // pred_check
    _
  $region11: #{main_model_forward.1} parent=0 // pred_check_branch
    %386 = sbr.rel (0) target = $region13
  $region12: #{main_model_forward.1} parent=0 // pred_region
    _
  $region13: #{main_model_forward.1} parent=0 // pred_fallthru
    _
  // Predicated region
  $region14: #{main_model_forward.1} parent=0 // pred_check
    _
  $region15: #{main_model_forward.1} parent=0 // pred_check_branch
    %388 = sbr.rel (0) target = $region17
  $region16: #{main_model_forward.1} parent=0 // pred_region
    _
  $region17: #{main_model_forward.1} parent=0 // pred_fallthru
    _

</llo_original>
